<compile_context>
chip_gen: v7x
topology: tpu7x:2x2x1
jax: 0.10.0
libtpu: 0.0.40
codegen_flags: <defaults>
</compile_context>

<pallas_src>
import math
import functools

import jax
import jax.numpy as jnp
from jax import lax
from jax.experimental import pallas as pl
from jax.experimental.pallas import tpu as pltpu


def _equal_linear_kernel(x_ref, w_ref, b_ref, o_ref, *,
                         scale, lr_mul, activation, compute_dtype,
                         negative_slope=0.2, act_gain=2.0 ** 0.5):
    # x_ref: (tb, in_dim)   VMEM, native dtype
    # w_ref: (tn, in_dim)   VMEM, native dtype (PyTorch layout, no transpose)
    # b_ref: (1, tn)        VMEM
    # o_ref: (tb, tn)       VMEM, lane-dense output tile
    x = x_ref[...]
    w = w_ref[...]
    if compute_dtype is not None:
        x = x.astype(compute_dtype)
        w = w.astype(compute_dtype)
    # (tb, in) . (tn, in)^T -> (tb, tn), f32 accumulator on the MXU.
    acc = lax.dot_general(
        x, w,
        dimension_numbers=(((1,), (1,)), ((), ())),
        preferred_element_type=jnp.float32)
    # Scalar equalization scale on the small output tile (not the weight).
    out = acc * scale + b_ref[...].astype(jnp.float32) * lr_mul
    if activation:
        # fused_leaky_relu with sqrt(2) folded into both branch multipliers.
        out = jnp.where(out >= 0.0,
                        out * act_gain,
                        out * (negative_slope * act_gain))
    o_ref[...] = out.astype(o_ref.dtype)


def _pick_tile(dim, cap, aligns):
    """Largest divisor of `dim` that is <= cap and a multiple of one of
    `aligns` (tried in preference order); falls back to the full dim
    (full-array blocks are always legal)."""
    cap = max(1, int(cap))
    for align in aligns:
        if dim % align == 0:
            t = min(cap, dim)
            t -= t % align
            while t >= align:
                if dim % t == 0:
                    return t
                t -= align
    return dim


def equal_linear(x, weight, bias, *, lr_mul=1.0, activation=None,
                 compute_dtype=None, max_tile_rows=None,
                 vmem_tile_budget_bytes=20 * 1024 * 1024):
    """x: (B, in_dim); weight: (out_dim, in_dim) [PyTorch layout]; bias: (out_dim,)."""
    batch, in_dim = x.shape
    out_dim, in_dim_w = weight.shape
    assert in_dim_w == in_dim
    assert bias.shape == (out_dim,)

    scale = (1.0 / math.sqrt(in_dim)) * lr_mul
    b2d = bias.reshape(1, out_dim)

    x_bpe = jnp.dtype(x.dtype).itemsize
    w_bpe = jnp.dtype(weight.dtype).itemsize
    b_bpe = jnp.dtype(bias.dtype).itemsize
    o_bpe = x_bpe

    # dtype-aware sublane alignment for the (second-minor) batch tile dim.
    sub = {4: 8, 2: 16, 1: 32}.get(x_bpe, 8)

    budget = int(vmem_tile_budget_bytes)

    # --- batch tile: prefer the whole batch resident (then the weight is
    #     streamed from HBM exactly once), as long as the double-buffered x
    #     tile stays under half the budget.
    tb_cap = max(sub, (budget // 2) // max(1, 2 * in_dim * x_bpe))
    if max_tile_rows is not None:
        tb_cap = min(tb_cap, max_tile_rows)
    tb = batch if batch <= tb_cap else _pick_tile(batch, tb_cap, (sub,))

    # --- out_dim tile: whatever fits the remaining double-buffered budget,
    #     preferring 256-alignment (v6e/v7x MXU), 128 fallback.
    rem = max(budget - 2 * tb * in_dim * x_bpe, budget // 8)
    tn_cap = max(128, rem // (2 * (in_dim * w_bpe + tb * o_bpe)))
    tn = _pick_tile(out_dim, tn_cap, (256, 128))

    num_i = batch // tb
    num_j = out_dim // tn

    # Guarantee >= 2 grid steps so both v7x TensorCores get work.
    if num_i * num_j == 1 and out_dim % 256 == 0:
        tn = out_dim // 2
        num_j = 2

    # --- grid ordering: put the operand with more HBM bytes on the axis whose
    #     block index changes least often (outer axis), so it is read once.
    x_bytes = batch * in_dim * x_bpe
    w_bytes = out_dim * in_dim * w_bpe
    batch_outer_reads = x_bytes + num_i * w_bytes      # i outer, j inner
    weight_outer_reads = num_j * x_bytes + w_bytes     # j outer, i inner

    if batch_outer_reads <= weight_outer_reads:
        grid = (num_i, num_j)
        x_map = lambda i, j: (i, 0)
        w_map = lambda i, j: (j, 0)
        b_map = lambda i, j: (0, j)
        o_map = lambda i, j: (i, j)
    else:
        grid = (num_j, num_i)
        x_map = lambda j, i: (i, 0)
        w_map = lambda j, i: (j, 0)
        b_map = lambda j, i: (0, j)
        o_map = lambda j, i: (i, j)

    # Double-buffered VMEM footprint; raise the scoped limit to match
    # (v5e's default scoped VMEM is only 16 MiB).
    footprint = 2 * (tb * in_dim * x_bpe + tn * in_dim * w_bpe
                     + tb * tn * o_bpe + tn * b_bpe)
    vmem_limit = max(32 * 1024 * 1024, footprint + 8 * 1024 * 1024)

    kernel = functools.partial(
        _equal_linear_kernel,
        scale=scale, lr_mul=float(lr_mul), activation=activation,
        compute_dtype=compute_dtype)

    return pl.pallas_call(
        kernel,
        out_shape=jax.ShapeDtypeStruct((batch, out_dim), x.dtype),
        grid_spec=pltpu.PrefetchScalarGridSpec(
            num_scalar_prefetch=0,
            grid=grid,
            in_specs=[
                pl.BlockSpec((tb, in_dim), x_map),
                pl.BlockSpec((tn, in_dim), w_map),
                pl.BlockSpec((1, tn), b_map),
            ],
            out_specs=pl.BlockSpec((tb, tn), o_map),
        ),
        compiler_params=pltpu.CompilerParams(
            dimension_semantics=("parallel", "parallel"),
            vmem_limit_bytes=int(vmem_limit)),
    )(x, weight, b2d)


def _reference(x, weight, bias, *, lr_mul=1.0, activation=None):
    scale = (1.0 / math.sqrt(weight.shape[1])) * lr_mul
    out = jnp.dot(x, (weight * scale).T, precision=lax.Precision.HIGHEST)
    out = out + (bias * lr_mul)[None, :]
    if activation:
        out = jnp.where(out >= 0, out, 0.2 * out) * (2.0 ** 0.5)
    return out


if __name__ == "__main__":
    key = jax.random.PRNGKey(0)
    k1, k2, k3, k4 = jax.random.split(key, 4)

    ok = True

    # Case 1: mapper-style layer (small batch of latents), lr_mul=0.01,
    # with and without the fused leaky-ReLU.  Whole batch stays resident,
    # the weight is streamed once, out_dim is split in two for v7x.
    batch, in_dim, out_dim, lr_mul = 8, 256, 512, 0.01
    x = jax.random.normal(k1, (batch, in_dim), dtype=jnp.float32)
    # weight ~ randn(out_dim, in_dim) / lr_mul (as in the PyTorch __init__)
    weight = jax.random.normal(k2, (out_dim, in_dim), dtype=jnp.float32) / lr_mul
    bias = jnp.zeros((out_dim,), dtype=jnp.float32)
    for activation in (None, "fused_lrelu"):
        out = jax.block_until_ready(
            equal_linear(x, weight, bias, lr_mul=lr_mul, activation=activation))
        ref = _reference(x, weight, bias, lr_mul=lr_mul, activation=activation)
        ok = ok and bool(jnp.allclose(out, ref, atol=1e-2, rtol=1e-2))

    # Case 2: batch larger than the row tile (exercises the weight-resident
    # grid ordering where the weight block index changes least often).
    batch, in_dim, out_dim, lr_mul = 32, 128, 256, 1.0
    x = jax.random.normal(k3, (batch, in_dim), dtype=jnp.float32)
    weight = jax.random.normal(k4, (out_dim, in_dim), dtype=jnp.float32) / lr_mul
    bias = 0.1 * jnp.ones((out_dim,), dtype=jnp.float32)
    out = jax.block_until_ready(
        equal_linear(x, weight, bias, lr_mul=lr_mul, activation="fused_lrelu",
                     max_tile_rows=8))
    ref = _reference(x, weight, bias, lr_mul=lr_mul, activation="fused_lrelu")
    ok = ok and bool(jnp.allclose(out, ref, atol=1e-2, rtol=1e-2))

    if ok:
        print("KERNEL_OK")
</pallas_src>

<mosaic_0001>
module attributes {stable_mosaic.version = 11 : i64} {
  func.func @_equal_linear_kernel(%arg0: i32, %arg1: i32, %arg2: memref<8x256xf32, #tpu.memory_space<vmem>>, %arg3: memref<256x256xf32, #tpu.memory_space<vmem>>, %arg4: memref<1x256xf32, #tpu.memory_space<vmem>>, %arg5: memref<8x256xf32, #tpu.memory_space<vmem>>) attributes {dimension_semantics = [#tpu.dimension_semantics<parallel>, #tpu.dimension_semantics<parallel>], iteration_bounds = array<i64: 1, 2>, scalar_prefetch = 0 : i64, scratch_operands = 0 : i64, tpu.core_type = #tpu.core_type<tc>, window_params = [{transform_indices = @transform_0, window_bounds = array<i64: 8, 256>}, {transform_indices = @transform_1, window_bounds = array<i64: 256, 256>}, {transform_indices = @transform_2, window_bounds = array<i64: 1, 256>}, {transform_indices = @transform_3, window_bounds = array<i64: 8, 256>}]} {
    %c0 = arith.constant 0 : index
    %c0_0 = arith.constant 0 : index
    %0 = vector.load %arg2[%c0, %c0_0] : memref<8x256xf32, #tpu.memory_space<vmem>>, vector<8x256xf32>
    %c0_1 = arith.constant 0 : index
    %c0_2 = arith.constant 0 : index
    %1 = vector.load %arg3[%c0_1, %c0_2] : memref<256x256xf32, #tpu.memory_space<vmem>>, vector<256x256xf32>
    %cst = arith.constant dense<0.000000e+00> : vector<8x256xf32>
    %2 = tpu.matmul %0, %1, %cst {dimension_numbers = #tpu.dot_dimension_numbers<[1], [1], [0], [0], [0, 0, 1, 0], [], []>} : vector<8x256xf32>, vector<256x256xf32>, vector<8x256xf32> -> vector<8x256xf32>
    %cst_3 = arith.constant 6.250000e-04 : f32
    %3 = vector.broadcast %cst_3 : f32 to vector<8x256xf32>
    %4 = arith.mulf %2, %3 : vector<8x256xf32>
    %c0_4 = arith.constant 0 : index
    %c0_5 = arith.constant 0 : index
    %5 = vector.load %arg4[%c0_4, %c0_5] : memref<1x256xf32, #tpu.memory_space<vmem>>, vector<1x256xf32>
    %cst_6 = arith.constant 0.00999999977 : f32
    %6 = vector.broadcast %cst_6 : f32 to vector<1x256xf32>
    %7 = arith.mulf %5, %6 : vector<1x256xf32>
    %8 = vector.broadcast %7 : vector<1x256xf32> to vector<8x256xf32>
    %9 = arith.addf %4, %8 : vector<8x256xf32>
    %c0_7 = arith.constant 0 : index
    %c0_8 = arith.constant 0 : index
    %10 = vector.load %arg5[%c0_7, %c0_8] : memref<8x256xf32, #tpu.memory_space<vmem>>, vector<8x256xf32>
    tpu.vector_store %arg5[%c0_7, %c0_8], %9 {strides = array<i32>} : memref<8x256xf32, #tpu.memory_space<vmem>>, vector<8x256xf32>,
    return
  }
  func.func @transform_0(%arg0: i32, %arg1: i32) -> (i32, i32) {
    %c0_i32 = arith.constant 0 : i32
    %c0_i32_0 = arith.constant 0 : i32
    return %arg0, %c0_i32 : i32, i32
  }
  func.func @transform_1(%arg0: i32, %arg1: i32) -> (i32, i32) {
    %c0_i32 = arith.constant 0 : i32
    %c0_i32_0 = arith.constant 0 : i32
    return %arg1, %c0_i32 : i32, i32
  }
  func.func @transform_2(%arg0: i32, %arg1: i32) -> (i32, i32) {
    %c0_i32 = arith.constant 0 : i32
    %c0_i32_0 = arith.constant 0 : i32
    return %c0_i32, %arg1 : i32, i32
  }
  func.func @transform_3(%arg0: i32, %arg1: i32) -> (i32, i32) {
    %c0_i32 = arith.constant 0 : i32
    return %arg0, %arg1 : i32, i32
  }
}

</mosaic_0001>

<llo_original>
// kernel: tpu_custom_call.1
$region0: #{tpu_custom_call.1}
  #allocation0 [shape = 'u32[]', space=smem, size = 0x4, offset = 0x4, fixed_abs, tag = 'smem constant byte address 0x4 - core index']
  #allocation1 [shape = 'u32[144,128]{1,0:T(1,128)}', space=vmem, size = 0x12000, scoped, tag = 'internal scratch']
  %s0 = inlined_call_operand.hbm [shape: f32[8,256], index: 0, kind: input, shape index: {}]
  %s1 = inlined_call_operand.hbm [shape: f32[512,256], index: 1, kind: input, shape index: {}]
  %s2 = inlined_call_operand.vmem [shape: f32[1,512], index: 2, kind: input, shape index: {}]
  %s3 = inlined_call_operand.hbm [shape: f32[8,512], index: 3, kind: output, shape index: {}]
  %s4 = sld [smem:[#allocation0]]
  $region53: #{tpu_custom_call.1} parent=0
    _
  %s6 = ssub.s32 1, %s4
  %s7 = scalar_select 0, %s6, %s4
  $region1: #{tpu_custom_call.1} parent=0
    #allocation2 [shape = 'u8[8192]{0}', space=vmem, size = 0x2000, scoped, tag = 'input window, operand 0, single buffered']
    #allocation3 [shape = 's32[2]{0}', space=sflag, size = 0x8, scoped, tag = 'scoped memory for tpu_custom_call.1']
    #allocation4 [shape = 's32[2]{0}', space=sflag, size = 0x8, scoped, tag = 'scoped memory for tpu_custom_call.1']
    #allocation5 [shape = 'u8[524288]{0}', space=vmem, size = 0x80000, scoped, tag = 'input window, operand 1']
    #allocation6 [shape = 's32[2]{0}', space=sflag, size = 0x8, scoped, tag = 'scoped memory for tpu_custom_call.1']
    #allocation7 [shape = 'u8[16384]{0}', space=vmem, size = 0x4000, scoped, tag = 'output window, operand 0']
    %8 = vsyncpa [#allocation3], 0
    %9 = vsyncpa [#allocation6], 0
    %s10 = scalar_lea.sflag [#allocation6], 1
    %11 = vsyncpa %s10, 0
    %12 = vsyncpa [#allocation4], 0
    %s13 = scalar_lea.sflag [#allocation4], 1
    %14 = vsyncpa %s13, 0
    loop: start=0, step=1, limit=4
    $region2: #{tpu_custom_call.1} parent=1 // loop_pre_header
      _
    $region3: #{tpu_custom_call.1} parent=1 // loop_header
      %s16 = sphi 0, %s20
      %p17 = scmp.ge.s32.totalorder %s16, 4
      %s23 = sphi 0, %s35
      %s24 = sphi 0, %s31
      %s25 = sphi 0, %s23
      %s26 = sphi 0, %s24
      %s27 = sphi 0, %s25
      %s28 = sphi 0, %s26
      %s38 = sphi 0, %s40
      %s41 = sphi 0, %s38
      %s42 = sphi 0, %s41
      %s58 = sphi 0, %s42
      %s64 = sphi 0, %s66
      %s67 = sphi 0, %s64
      %s68 = sphi 0, %s67
      %s84 = sphi 0, %s68
      %s90 = sphi 0, %s92
      %s93 = sphi 0, %s90
      %s94 = sphi 0, %s93
      %s110 = sphi 0, %s94
      %s118 = sphi 0, %s120
      %s121 = sphi 0, %s118
      %s122 = sphi 0, %s121
      %s138 = sphi 0, %s122
    $region4: #{tpu_custom_call.1} parent=1 // loop_header_branch
      %19 = sbr.rel (%p17) target = $region8
    $region5: #{tpu_custom_call.1} parent=1 // loop_body
      %s21 = ssub.s32 %s16, 1
      %s22 = ssub.s32 %s16, 2
      %s29 = sadd.s32 1, %s24
      %p30 = scmp.ge.s32.totalorder %s29, 2
      %s31 = scalar_select %p30, 0, %s29
      %s32 = sadd.s32 1, %s23
      %s33 = scalar_select %p30, %s32, %s23
      %p34 = scmp.ge.s32.totalorder %s33, 1
      %s35 = scalar_select %p34, 0, %s33
      %s36 = ssub.s32 %s23, %s35
      %p37 = scmp.eq.s32.totalorder %s36, 0
      %s39 = sadd.s32 %s38, 1
      %s40 = scalar_select %p37, %s38, %s39
      %p43 = pneg %p37
      %p44 = scmp.eq.s32.totalorder %s16, 1
      %p45 = por %p43, %p44
      %p46 = scmp.ne.s32.totalorder %s38, %s41
      %p47 = scmp.eq.s32.totalorder %s16, 0
      %p48 = por %p46, %p47
      %p49 = scmp.ne.s32.totalorder %s38, %s41
      %p50 = scmp.eq.s32.totalorder %s21, 1
      %p51 = por %p49, %p50
      %p52 = scmp.ne.s32.totalorder %s41, %s42
      %p53 = scmp.eq.s32.totalorder %s21, 0
      %p54 = por %p52, %p53
      %p55 = scmp.ne.s32.totalorder %s41, %s42
      %p56 = scmp.eq.s32.totalorder %s22, 1
      %p57 = por %p55, %p56
      %p59 = scmp.ne.s32.totalorder %s42, %s58
      %p60 = scmp.eq.s32.totalorder %s22, 0
      %p61 = por %p59, %p60
      %s62 = ssub.s32 %s24, %s31
      %p63 = scmp.eq.s32.totalorder %s62, 0
      %s65 = sadd.s32 %s64, 1
      %s66 = scalar_select %p63, %s64, %s65
      %p69 = pneg %p63
      %p70 = scmp.eq.s32.totalorder %s16, 1
      %p71 = por %p69, %p70
      %p72 = scmp.ne.s32.totalorder %s64, %s67
      %p73 = scmp.eq.s32.totalorder %s16, 0
      %p74 = por %p72, %p73
      %p75 = scmp.ne.s32.totalorder %s64, %s67
      %p76 = scmp.eq.s32.totalorder %s21, 1
      %p77 = por %p75, %p76
      %p78 = scmp.ne.s32.totalorder %s67, %s68
      %p79 = scmp.eq.s32.totalorder %s21, 0
      %p80 = por %p78, %p79
      %p81 = scmp.ne.s32.totalorder %s67, %s68
      %p82 = scmp.eq.s32.totalorder %s22, 1
      %p83 = por %p81, %p82
      %p85 = scmp.ne.s32.totalorder %s68, %s84
      %p86 = scmp.eq.s32.totalorder %s22, 0
      %p87 = por %p85, %p86
      %s88 = ssub.s32 %s24, %s31
      %p89 = scmp.eq.s32.totalorder %s88, 0
      %s91 = sadd.s32 %s90, 1
      %s92 = scalar_select %p89, %s90, %s91
      %p95 = pneg %p89
      %p96 = scmp.eq.s32.totalorder %s16, 1
      %p97 = por %p95, %p96
      %p98 = scmp.ne.s32.totalorder %s90, %s93
      %p99 = scmp.eq.s32.totalorder %s16, 0
      %p100 = por %p98, %p99
      %p101 = scmp.ne.s32.totalorder %s90, %s93
      %p102 = scmp.eq.s32.totalorder %s21, 1
      %p103 = por %p101, %p102
      %p104 = scmp.ne.s32.totalorder %s93, %s94
      %p105 = scmp.eq.s32.totalorder %s21, 0
      %p106 = por %p104, %p105
      %p107 = scmp.ne.s32.totalorder %s93, %s94
      %p108 = scmp.eq.s32.totalorder %s22, 1
      %p109 = por %p107, %p108
      %p111 = scmp.ne.s32.totalorder %s94, %s110
      %p112 = scmp.eq.s32.totalorder %s22, 0
      %p113 = por %p111, %p112
      %s114 = ssub.s32 %s23, %s35
      %s115 = ssub.s32 %s24, %s31
      %s116 = sor.u32 %s114, %s115
      %p117 = scmp.eq.s32.totalorder %s116, 0
      %s119 = sadd.s32 %s118, 1
      %s120 = scalar_select %p117, %s118, %s119
      %p123 = pneg %p117
      %p124 = scmp.eq.s32.totalorder %s16, 1
      %p125 = por %p123, %p124
      %p126 = scmp.ne.s32.totalorder %s118, %s121
      %p127 = scmp.eq.s32.totalorder %s16, 0
      %p128 = por %p126, %p127
      %p129 = scmp.ne.s32.totalorder %s118, %s121
      %p130 = scmp.eq.s32.totalorder %s21, 1
      %p131 = por %p129, %p130
      %p132 = scmp.ne.s32.totalorder %s121, %s122
      %p133 = scmp.eq.s32.totalorder %s21, 0
      %p134 = por %p132, %p133
      %p135 = scmp.ne.s32.totalorder %s121, %s122
      %p136 = scmp.eq.s32.totalorder %s22, 1
      %p137 = por %p135, %p136
      %p139 = scmp.ne.s32.totalorder %s122, %s138
      %p140 = scmp.eq.s32.totalorder %s22, 0
      %p141 = por %p139, %p140
      %p142 = scmp.le.s32.totalorder 1, %s16
      %p143 = scmp.lt.s32.totalorder %s16, 3
      %p144 = pnand %p142, %p143
      %p145 = pneg %p144
      // Predicated region
      $region9: #{tpu_custom_call.1} parent=5 // pred_check
        _
      $region10: #{tpu_custom_call.1} parent=5 // pred_check_branch
        %147 = sbr.rel (%p144) target = $region12
      $region11: #{tpu_custom_call.1} parent=5 // pred_region
        %s148 = ssub.s32 %s16, 1
        // Predicated region
        $region13: #{tpu_custom_call.1} parent=11 // pred_check
          %p149 = pneg %p54
        $region14: #{tpu_custom_call.1} parent=11 // pred_check_branch
          %151 = sbr.rel (%p149) target = $region16
        $region15: #{tpu_custom_call.1} parent=11 // pred_region
          %s153 = ssub.s32 256, 256
          %154 = vsyncadd [#allocation3], %s153
          %s155 = smul.addr %s25, 2
          %s156 = smul.addr %s155, 128
          %s157 = scalar_lea.hbm %s0, %s156
          %s159 = sshll.u32 [#allocation2], 4
          %s160 = int_to_ptr.vmem [resolvable:$true] %s159
          %162 = dma.hbm_to_vmem [thread:$0]  %s157, 256, %s160, [#allocation3]
        $region16: #{tpu_custom_call.1} parent=11 // pred_fallthru
          _
      $region12: #{tpu_custom_call.1} parent=5 // pred_fallthru
        _
      %p163 = scmp.lt.s32.totalorder %s16, 2
      // Predicated region
      $region17: #{tpu_custom_call.1} parent=5 // pred_check
        %p164 = pneg %p163
      $region18: #{tpu_custom_call.1} parent=5 // pred_check_branch
        %166 = sbr.rel (%p164) target = $region20
      $region19: #{tpu_custom_call.1} parent=5 // pred_region
        // Predicated region
        $region21: #{tpu_custom_call.1} parent=19 // pred_check
          %p167 = pneg %p74
        $region22: #{tpu_custom_call.1} parent=19 // pred_check_branch
          %169 = sbr.rel (%p167) target = $region24
        $region23: #{tpu_custom_call.1} parent=19 // pred_region
          %s170 = sand.u32 %s64, 1
          %s171 = scalar_lea.sflag [#allocation6], %s170
          %s172 = sand.u32 %s64, 1
          %s173 = smul.addr %s172, 512
          %s174 = scalar_lea.vmem [#allocation5], %s173
          %s175 = smul.u32 32, %s24
          %s177 = ssub.s32 8192, 8192
          %178 = vsyncadd %s171, %s177
          %s179 = smul.addr %s175, 2
          %s180 = smul.addr %s179, 128
          %s181 = scalar_lea.hbm %s1, %s180
          %s182 = sshll.u32 %s174, 4
          %s183 = int_to_ptr.vmem [resolvable:$true] %s182
          %188 = dma.hbm_to_vmem [thread:$0]  %s181, 8192, %s183, %s171, 256, 256, 16
        $region24: #{tpu_custom_call.1} parent=19 // pred_fallthru
          _
        // Predicated region
        $region25: #{tpu_custom_call.1} parent=19 // pred_check
          %p189 = pneg %p100
        $region26: #{tpu_custom_call.1} parent=19 // pred_check_branch
          %191 = sbr.rel (%p189) target = $region28
        $region27: #{tpu_custom_call.1} parent=19 // pred_region
          %s192 = smul.u32 2, %s24
          %p193 = scmp.lt.s32.totalorder %s192, 3
          %s194 = scalar_select %p193, %s192, 3
          %s195 = scalar_lea.vmem %s2, %s194
          %s196 = smul.u32 2, %s24
        $region28: #{tpu_custom_call.1} parent=19 // pred_fallthru
          _
      $region20: #{tpu_custom_call.1} parent=5 // pred_fallthru
        _
      %p197 = scmp.le.s32.totalorder 1, %s16
      %p198 = scmp.lt.s32.totalorder %s16, 3
      %p199 = pnand %p197, %p198
      %p200 = pneg %p199
      // Predicated region
      $region29: #{tpu_custom_call.1} parent=5 // pred_check
        _
      $region30: #{tpu_custom_call.1} parent=5 // pred_check_branch
        %202 = sbr.rel (%p199) target = $region32
      $region31: #{tpu_custom_call.1} parent=5 // pred_region
        %s203 = ssub.s32 %s16, 1
        // Predicated region
        $region33: #{tpu_custom_call.1} parent=31 // pred_check
          %p204 = pneg %p54
        $region34: #{tpu_custom_call.1} parent=31 // pred_check_branch
          %206 = sbr.rel (%p204) target = $region36
        $region35: #{tpu_custom_call.1} parent=31 // pred_region
          %207 = dma.done [#allocation3], 256
        $region36: #{tpu_custom_call.1} parent=31 // pred_fallthru
          _
        %s208 = sand.u32 %s67, 1
        %s209 = scalar_lea.sflag [#allocation6], %s208
        %s210 = sand.u32 %s67, 1
        %s211 = smul.addr %s210, 512
        %s212 = scalar_lea.vmem [#allocation5], %s211
        // Predicated region
        $region37: #{tpu_custom_call.1} parent=31 // pred_check
          %p213 = pneg %p80
        $region38: #{tpu_custom_call.1} parent=31 // pred_check_branch
          %215 = sbr.rel (%p213) target = $region40
        $region39: #{tpu_custom_call.1} parent=31 // pred_region
          %216 = dma.done %s209, 8192
        $region40: #{tpu_custom_call.1} parent=31 // pred_fallthru
          _
        %p217 = pneg %p54
        %p218 = pneg %p51
        %s219 = sand.u32 %s67, 1
        %s220 = scalar_lea.sflag [#allocation6], %s219
        %s221 = sand.u32 %s67, 1
        %s222 = smul.addr %s221, 512
        %s223 = scalar_lea.vmem [#allocation5], %s222
        %p224 = pneg %p80
        %p225 = pneg %p77
        %s226 = smul.u32 2, %s26
        %p227 = scmp.lt.s32.totalorder %s226, 3
        %s228 = scalar_select %p227, %s226, 3
        %s229 = scalar_lea.vmem %s2, %s228
        %p230 = pneg %p106
        %p231 = pneg %p103
        %p232 = pneg %p134
        %p233 = pneg %p131
        %s234 = sand.u32 %s121, 1
        %s235 = scalar_lea.sflag [#allocation4], %s234
        %s236 = sand.u32 %s121, 1
        %s237 = smul.addr %s236, 16
        %s238 = scalar_lea.vmem [#allocation7], %s237
        %s239 = smul.u32 32, %s26
        %s240 = smul.u32 2, %s26
        %p241 = scmp.lt.s32.totalorder %s240, 3
        %s242 = scalar_select %p241, %s240, 3
        %s243 = scalar_lea.vmem %s2, %s242
        %s244 = smul.u32 2, %s26
        %s245 = smul.u32 2, %s26
        %v246 = vld [vmem:[#allocation2] sm:$0xff]
        %v247 = vld [vmem:[#allocation2 + $0x8] sm:$0xff]
        %v248 = vld [vmem:[%s212] sm:$0xff]
        %v249 = vld [vmem:[%s212 + $0x8] sm:$0xff]
        %v250 = vld [vmem:[%s212 + $0x10] sm:$0xff]
        %v251 = vld [vmem:[%s212 + $0x18] sm:$0xff]
        %v252 = vld [vmem:[%s212 + $0x20] sm:$0xff]
        %v253 = vld [vmem:[%s212 + $0x28] sm:$0xff]
        %v254 = vld [vmem:[%s212 + $0x30] sm:$0xff]
        %v255 = vld [vmem:[%s212 + $0x38] sm:$0xff]
        %v256 = vld [vmem:[%s212 + $0x40] sm:$0xff]
        %v257 = vld [vmem:[%s212 + $0x48] sm:$0xff]
        %v258 = vld [vmem:[%s212 + $0x50] sm:$0xff]
        %v259 = vld [vmem:[%s212 + $0x58] sm:$0xff]
        %v260 = vld [vmem:[%s212 + $0x60] sm:$0xff]
        %v261 = vld [vmem:[%s212 + $0x68] sm:$0xff]
        %v262 = vld [vmem:[%s212 + $0x70] sm:$0xff]
        %v263 = vld [vmem:[%s212 + $0x78] sm:$0xff]
        %v264 = vld [vmem:[%s212 + $0x80] sm:$0xff]
        %v265 = vld [vmem:[%s212 + $0x88] sm:$0xff]
        %v266 = vld [vmem:[%s212 + $0x90] sm:$0xff]
        %v267 = vld [vmem:[%s212 + $0x98] sm:$0xff]
        %v268 = vld [vmem:[%s212 + $0xa0] sm:$0xff]
        %v269 = vld [vmem:[%s212 + $0xa8] sm:$0xff]
        %v270 = vld [vmem:[%s212 + $0xb0] sm:$0xff]
        %v271 = vld [vmem:[%s212 + $0xb8] sm:$0xff]
        %v272 = vld [vmem:[%s212 + $0xc0] sm:$0xff]
        %v273 = vld [vmem:[%s212 + $0xc8] sm:$0xff]
        %v274 = vld [vmem:[%s212 + $0xd0] sm:$0xff]
        %v275 = vld [vmem:[%s212 + $0xd8] sm:$0xff]
        %v276 = vld [vmem:[%s212 + $0xe0] sm:$0xff]
        %v277 = vld [vmem:[%s212 + $0xe8] sm:$0xff]
        %v278 = vld [vmem:[%s212 + $0xf0] sm:$0xff]
        %v279 = vld [vmem:[%s212 + $0xf8] sm:$0xff]
        %v280 = vld [vmem:[%s212 + $0x100] sm:$0xff]
        %v281 = vld [vmem:[%s212 + $0x108] sm:$0xff]
        %v282 = vld [vmem:[%s212 + $0x110] sm:$0xff]
        %v283 = vld [vmem:[%s212 + $0x118] sm:$0xff]
        %v284 = vld [vmem:[%s212 + $0x120] sm:$0xff]
        %v285 = vld [vmem:[%s212 + $0x128] sm:$0xff]
        %v286 = vld [vmem:[%s212 + $0x130] sm:$0xff]
        %v287 = vld [vmem:[%s212 + $0x138] sm:$0xff]
        %v288 = vld [vmem:[%s212 + $0x140] sm:$0xff]
        %v289 = vld [vmem:[%s212 + $0x148] sm:$0xff]
        %v290 = vld [vmem:[%s212 + $0x150] sm:$0xff]
        %v291 = vld [vmem:[%s212 + $0x158] sm:$0xff]
        %v292 = vld [vmem:[%s212 + $0x160] sm:$0xff]
        %v293 = vld [vmem:[%s212 + $0x168] sm:$0xff]
        %v294 = vld [vmem:[%s212 + $0x170] sm:$0xff]
        %v295 = vld [vmem:[%s212 + $0x178] sm:$0xff]
        %v296 = vld [vmem:[%s212 + $0x180] sm:$0xff]
        %v297 = vld [vmem:[%s212 + $0x188] sm:$0xff]
        %v298 = vld [vmem:[%s212 + $0x190] sm:$0xff]
        %v299 = vld [vmem:[%s212 + $0x198] sm:$0xff]
        %v300 = vld [vmem:[%s212 + $0x1a0] sm:$0xff]
        %v301 = vld [vmem:[%s212 + $0x1a8] sm:$0xff]
        %v302 = vld [vmem:[%s212 + $0x1b0] sm:$0xff]
        %v303 = vld [vmem:[%s212 + $0x1b8] sm:$0xff]
        %v304 = vld [vmem:[%s212 + $0x1c0] sm:$0xff]
        %v305 = vld [vmem:[%s212 + $0x1c8] sm:$0xff]
        %v306 = vld [vmem:[%s212 + $0x1d0] sm:$0xff]
        %v307 = vld [vmem:[%s212 + $0x1d8] sm:$0xff]
        %v308 = vld [vmem:[%s212 + $0x1e0] sm:$0xff]
        %v309 = vld [vmem:[%s212 + $0x1e8] sm:$0xff]
        %v310 = vld [vmem:[%s212 + $0x1f0] sm:$0xff]
        %v311 = vld [vmem:[%s212 + $0x1f8] sm:$0xff]
        %312 = vmatprep.subr.mxu0 %v249
        %313 = vmatpush1.xpose.msra.mxu0 %v248
        %314 = vmatprep.subr.mxu0 %v251
        %315 = vmatpush1.xpose.msra.mxu0 %v250
        %316 = vmatprep.subr.mxu0 %v253
        %317 = vmatpush1.xpose.msra.mxu0 %v252
        %318 = vmatprep.subr.mxu0 %v255
        %319 = vmatpush1.xpose.msra.mxu0 %v254
        %320 = vmatprep.subr.mxu0 %v257
        %321 = vmatpush1.xpose.msra.mxu0 %v256
        %322 = vmatprep.subr.mxu0 %v259
        %323 = vmatpush1.xpose.msra.mxu0 %v258
        %324 = vmatprep.subr.mxu0 %v261
        %325 = vmatpush1.xpose.msra.mxu0 %v260
        %326 = vmatprep.subr.mxu0 %v263
        %327 = vmatpush1.xpose.msra.mxu0 %v262
        %328 = vmatprep.subr.mxu0 %v265
        %329 = vmatpush1.xpose.msra.mxu0 %v264
        %330 = vmatprep.subr.mxu0 %v267
        %331 = vmatpush1.xpose.msra.mxu0 %v266
        %332 = vmatprep.subr.mxu0 %v269
        %333 = vmatpush1.xpose.msra.mxu0 %v268
        %334 = vmatprep.subr.mxu0 %v271
        %335 = vmatpush1.xpose.msra.mxu0 %v270
        %336 = vmatprep.subr.mxu0 %v273
        %337 = vmatpush1.xpose.msra.mxu0 %v272
        %338 = vmatprep.subr.mxu0 %v275
        %339 = vmatpush1.xpose.msra.mxu0 %v274
        %340 = vmatprep.subr.mxu0 %v277
        %341 = vmatpush1.xpose.msra.mxu0 %v276
        %342 = vmatprep.subr.mxu0 %v279
        %343 = vmatpush1.xpose.msra.mxu0 %v278
        %344 = vmatprep.subr.mxu0 %v281
        %345 = vmatpush1.xpose.msra.mxu0 %v280
        %346 = vmatprep.subr.mxu0 %v283
        %347 = vmatpush1.xpose.msra.mxu0 %v282
        %348 = vmatprep.subr.mxu0 %v285
        %349 = vmatpush1.xpose.msra.mxu0 %v284
        %350 = vmatprep.subr.mxu0 %v287
        %351 = vmatpush1.xpose.msra.mxu0 %v286
        %352 = vmatprep.subr.mxu0 %v289
        %353 = vmatpush1.xpose.msra.mxu0 %v288
        %354 = vmatprep.subr.mxu0 %v291
        %355 = vmatpush1.xpose.msra.mxu0 %v290
        %356 = vmatprep.subr.mxu0 %v293
        %357 = vmatpush1.xpose.msra.mxu0 %v292
        %358 = vmatprep.subr.mxu0 %v295
        %359 = vmatpush1.xpose.msra.mxu0 %v294
        %360 = vmatprep.subr.mxu0 %v297
        %361 = vmatpush1.xpose.msra.mxu0 %v296
        %362 = vmatprep.subr.mxu0 %v299
        %363 = vmatpush1.xpose.msra.mxu0 %v298
        %364 = vmatprep.subr.mxu0 %v301
        %365 = vmatpush1.xpose.msra.mxu0 %v300
        %366 = vmatprep.subr.mxu0 %v303
        %367 = vmatpush1.xpose.msra.mxu0 %v302
        %368 = vmatprep.subr.mxu0 %v305
        %369 = vmatpush1.xpose.msra.mxu0 %v304
        %370 = vmatprep.subr.mxu0 %v307
        %371 = vmatpush1.xpose.msra.mxu0 %v306
        %372 = vmatprep.subr.mxu0 %v309
        %373 = vmatpush1.xpose.msra.mxu0 %v308
        %374 = vmatprep.subr.mxu0 %v311
        %375 = vmatpush1.xpose.msra.mxu0 %v310
        %376 = vmatprep.mubr.f32.mxu0 %v247
        %377 = vmatmul.mubr.f32.gmra.mrb[0].mxu0 %v246
        %v378 = vpop.f32.mrb[0].mxu0
        %v379 = vadd.f32 0.0, %v378
        %v380 = vpop.f32.mrb[0].mxu0
        %v381 = vadd.f32 0.0, %v380
        %382 = vdwg.mxu0
        %v383 = vmul.f32 %v379, 0.000625
        %v384 = vmul.f32 %v381, 0.000625
        %v385 = vld [vmem:[%s243] sm:$0x3]
        %v386 = vmul.f32 %v385, 0.01
        %v388 = vlaneseq
        %v389 = vshrl.u32 %v388, 7
        %v390 = vsub.s32 0, %v389
        %v391 = vrot.slane %v386, %v390
        %v392 = vlaneseq
        %v393 = vshrl.u32 %v392, 7
        %v394 = vsub.s32 1, %v393
        %v395 = vrot.slane %v386, %v394
        %v398 = vadd.f32 %v383, %v391
        %v399 = vadd.f32 %v384, %v395
        %400 = vst [vmem:[%s238] sm:$0xff] %v398
        %401 = vst [vmem:[%s238 + $0x8] sm:$0xff] %v399
        %s402 = sand.u32 %s121, 1
        %s403 = scalar_lea.sflag [#allocation4], %s402
        %s404 = sand.u32 %s121, 1
        %s405 = smul.addr %s404, 16
        %s406 = scalar_lea.vmem [#allocation7], %s405
        // Predicated region
        $region41: #{tpu_custom_call.1} parent=31 // pred_check
          %p407 = pneg %p131
        $region42: #{tpu_custom_call.1} parent=31 // pred_check_branch
          %409 = sbr.rel (%p407) target = $region44
        $region43: #{tpu_custom_call.1} parent=31 // pred_region
          %s410 = smul.u32 2, %s26
          %s412 = ssub.s32 256, 256
          %413 = vsyncadd %s403, %s412
          %s414 = smul.addr %s25, 4
          %s415 = sadd.s32 %s410, %s414
          %s416 = smul.addr %s415, 128
          %s417 = scalar_lea.hbm %s3, %s416
          %s419 = sshll.u32 %s406, 4
          %s420 = int_to_ptr.vmem [resolvable:$true] %s419
          %422 = dma.vmem_to_hbm [thread:$0]  %s420, 256, %s417, %s403
        $region44: #{tpu_custom_call.1} parent=31 // pred_fallthru
          _
      $region32: #{tpu_custom_call.1} parent=5 // pred_fallthru
        _
      %p423 = scmp.le.s32.totalorder 2, %s16
      // Predicated region
      $region45: #{tpu_custom_call.1} parent=5 // pred_check
        %p424 = pneg %p423
      $region46: #{tpu_custom_call.1} parent=5 // pred_check_branch
        %426 = sbr.rel (%p424) target = $region48
      $region47: #{tpu_custom_call.1} parent=5 // pred_region
        %s427 = ssub.s32 %s16, 2
        // Predicated region
        $region49: #{tpu_custom_call.1} parent=47 // pred_check
          %p428 = pneg %p137
        $region50: #{tpu_custom_call.1} parent=47 // pred_check_branch
          %430 = sbr.rel (%p428) target = $region52
        $region51: #{tpu_custom_call.1} parent=47 // pred_region
          %s431 = sand.u32 %s122, 1
          %s432 = scalar_lea.sflag [#allocation4], %s431
          %s433 = sand.u32 %s122, 1
          %s434 = smul.addr %s433, 16
          %s435 = scalar_lea.vmem [#allocation7], %s434
          %436 = dma.done %s432, 256
        $region52: #{tpu_custom_call.1} parent=47 // pred_fallthru
          _
      $region48: #{tpu_custom_call.1} parent=5 // pred_fallthru
        _
    $region6: #{tpu_custom_call.1} parent=1 // loop_footer
      %s20 = sadd.s32 1, %s16
    $region7: #{tpu_custom_call.1} parent=1 // loop_footer_branch
      %15 = sbr.rel target = $region3
    $region8: #{tpu_custom_call.1} parent=1 // loop_exit
      _
    %437 = vsyncpa [#allocation3], 1
    %s438 = scalar_lea.sflag [#allocation3], 1
    %439 = vsyncpa %s438, 1
    %440 = vsyncpa [#allocation6], 1
    %s441 = scalar_lea.sflag [#allocation6], 1
    %442 = vsyncpa %s441, 1
    %443 = vsyncpa [#allocation4], 1
    %s444 = scalar_lea.sflag [#allocation4], 1
    %445 = vsyncpa %s444, 1

</llo_original>
